<compile_context>
chip_gen: v5e
topology: v5e:2x2
jax: 0.10.0
libtpu: 0.0.40
codegen_flags: <defaults>
</compile_context>

<pallas_src>
import functools
import math

import jax
import jax.numpy as jnp
from jax.experimental import pallas as pl
from jax.experimental.pallas import tpu as pltpu


NGF = 64
N_DOWNSAMPLING = 5
BN_EPS = 1e-5


def _round_up(x, m):
    return (x + m - 1) // m * m


# --------------------------------------------------------------------------
# ConvTranspose2d(k=3, s=2, p=1, op=1) sub-pixel (parity) decomposition.
#
# For output pixel (2m+dy, 2n+dx) (parity p = 2*dy + dx) only these taps of
# the 3x3 kernel contribute, applied to the 2x2 input neighborhood
# {x[m,n], x[m,n+1], x[m+1,n], x[m+1,n+1]} (zero-padded at the bottom/right):
#   p=0 (ee): x00*w[1,1]
#   p=1 (eo): x00*w[1,2] + x01*w[1,0]
#   p=2 (oe): x00*w[2,1] + x10*w[0,1]
#   p=3 (oo): x00*w[2,2] + x01*w[2,0] + x10*w[0,2] + x11*w[0,0]
# The 9 (parity, tap) pairs below are grouped by parity so the accumulator is
# zeroed on the first tap of a parity and flushed on the last.
TAP_KYKX   = ((1, 1), (1, 2), (1, 0), (2, 1), (0, 1), (2, 2), (2, 0), (0, 2), (0, 0))
TAP_ABLOCK = (0, 0, 1, 0, 2, 0, 1, 2, 3)   # which column-block of A (x00,x01,x10,x11)
TAP_PARITY = (0, 1, 1, 2, 2, 3, 3, 3, 3)   # which output parity block
TAP_FIRST  = (1, 1, 0, 1, 0, 1, 0, 0, 0)
TAP_LAST   = (1, 0, 1, 0, 1, 0, 0, 0, 1)


# ------------------------- Pallas kernels -------------------------

def _tap_matmul_kernel(tb_ref, tp_ref, tf_ref, tl_ref, a_ref, b_ref, o_ref, acc_ref):
    """One grid step = one (row-tile, tap).  Accumulates into the parity block
    selected by the scalar-prefetch tables."""
    t = pl.program_id(1)

    @pl.when(tf_ref[t] == 1)
    def _():
        acc_ref[...] = jnp.zeros_like(acc_ref)

    acc_ref[...] += jnp.dot(a_ref[...], b_ref[...],
                            preferred_element_type=jnp.float32)

    @pl.when(tl_ref[t] == 1)
    def _():
        o_ref[...] = acc_ref[...]


def _bn_relu_kernel(x_ref, gamma_ref, beta_ref, o_ref, *, eps):
    x = x_ref[...].astype(jnp.float32)
    mean = jnp.mean(x, axis=0, keepdims=True)
    centered = x - mean
    var = jnp.mean(centered * centered, axis=0, keepdims=True)   # biased, as torch BN
    inv = jax.lax.rsqrt(var + eps)
    y = centered * (inv * gamma_ref[...]) + beta_ref[...]
    o_ref[...] = jnp.maximum(y, 0.0).astype(o_ref.dtype)


def _conv7_tanh_kernel(x_ref, w_ref, b_ref, o_ref, acc_ref, *, th, ow, kh, kw):
    """Fused valid 7x7 conv + bias + tanh.  x_ref holds the whole padded image
    (VMEM-resident across the row-tile grid); the 49 taps are walked in-kernel."""
    r0 = pl.program_id(1) * th
    acc_ref[...] = jnp.zeros_like(acc_ref)
    for ky in range(kh):
        for kx in range(kw):
            patch = x_ref[pl.ds(r0 + ky, th), kx:kx + ow, :]     # (th, ow, Cin)
            acc_ref[...] += jnp.dot(patch.reshape(th * ow, patch.shape[-1]),
                                    w_ref[ky * kw + kx],
                                    preferred_element_type=jnp.float32)
    o_ref[...] = jnp.tanh(acc_ref[...] + b_ref[...])


# ------------------------- kernel wrappers -------------------------

def conv_transpose2d_parity(x, b_packed):
    """PyTorch ConvTranspose2d(k=3,s=2,p=1,op=1,bias=False), parity form.
    x: [N,H,W,Cin] bf16, b_packed: [9*Cin, Cout_p] bf16 (tap-major, see packer).
    Returns ([N*H*W, 4*Cout_p] f32, parity-major columns, and (N,H,W))."""
    n, h, w, cin = x.shape
    cout_p = b_packed.shape[1]
    m = n * h * w

    # 2x2 neighborhood "im2col" (only 4 taps, on the *input* resolution).
    xp = jnp.pad(x, ((0, 0), (0, 1), (0, 1), (0, 0)))
    a = jnp.concatenate(
        [xp[:, :h, :w, :], xp[:, :h, 1:, :], xp[:, 1:, :w, :], xp[:, 1:, 1:, :]],
        axis=-1).reshape(m, 4 * cin)

    # Row tile: multiple of 8, sized so the f32 accumulator stays <= 512 KiB.
    tm_cap = max(8, min(1024, (512 * 1024 // (4 * cout_p)) // 8 * 8))
    m_pad = _round_up(m, 8)
    tm = min(tm_cap, m_pad)
    m_pad = _round_up(m_pad, tm)
    if m_pad != m:
        a = jnp.pad(a, ((0, m_pad - m), (0, 0)))

    tb = jnp.asarray(TAP_ABLOCK, jnp.int32)
    tp = jnp.asarray(TAP_PARITY, jnp.int32)
    tf = jnp.asarray(TAP_FIRST, jnp.int32)
    tl = jnp.asarray(TAP_LAST, jnp.int32)

    out = pl.pallas_call(
        _tap_matmul_kernel,
        out_shape=jax.ShapeDtypeStruct((m_pad, 4 * cout_p), jnp.float32),
        grid_spec=pltpu.PrefetchScalarGridSpec(
            num_scalar_prefetch=4,
            grid=(m_pad // tm, 9),
            in_specs=[
                pl.BlockSpec((tm, cin), lambda i, t, tb, tp, tf, tl: (i, tb[t])),
                pl.BlockSpec((cin, cout_p), lambda i, t, tb, tp, tf, tl: (t, 0)),
            ],
            out_specs=pl.BlockSpec((tm, cout_p),
                                   lambda i, t, tb, tp, tf, tl: (i, tp[t])),
            scratch_shapes=[pltpu.VMEM((tm, cout_p), jnp.float32)],
        ),
        compiler_params=pltpu.CompilerParams(
            dimension_semantics=("parallel", "arbitrary")),
    )(tb, tp, tf, tl, a, b_packed)
    return out[:m], (n, h, w)


def _parity_to_nhwc(out, n, h, w, cout, cout_p):
    """[N*H*W, 4*Cout_p] parity-major -> [N, 2H, 2W, Cout]."""
    out = out.reshape(n, h, w, 4, cout_p)[..., :cout]
    out = out.reshape(n, h, w, 2, 2, cout).transpose(0, 1, 3, 2, 4, 5)
    return out.reshape(n, 2 * h, 2 * w, cout)


def bn_relu(x, gamma, beta, eps=BN_EPS):
    """Training-mode BatchNorm2d (batch stats) + ReLU on x: [M, C].  Channel-
    tiled grid ('parallel') so multi-TensorCore chips split the work."""
    m, c = x.shape
    tc = c if c % 128 else min(c, 512)
    return pl.pallas_call(
        functools.partial(_bn_relu_kernel, eps=eps),
        out_shape=jax.ShapeDtypeStruct((m, c), jnp.bfloat16),
        grid_spec=pltpu.PrefetchScalarGridSpec(
            num_scalar_prefetch=0,
            grid=(c // tc,),
            in_specs=[
                pl.BlockSpec((m, tc), lambda j: (0, j)),
                pl.BlockSpec((1, tc), lambda j: (0, j)),
                pl.BlockSpec((1, tc), lambda j: (0, j)),
            ],
            out_specs=pl.BlockSpec((m, tc), lambda j: (0, j)),
        ),
        compiler_params=pltpu.CompilerParams(dimension_semantics=("parallel",)),
    )(x, gamma.reshape(1, c), beta.reshape(1, c))
    # TODO(synk): BN stats could be fused into the conv-transpose matmul
    # epilogue (per-tile sum/sumsq) to save one activation round-trip.


def conv7x7_tanh(xpad, w_packed, bias_p):
    """Fused valid 7x7 conv + bias + tanh.
    xpad: [N, OH+6, OW+6, Cin] bf16 (already reflection padded),
    w_packed: [49, Cin, Cout_p] bf16, bias_p: [1, Cout_p] f32.
    Returns [N, OH*OW, Cout_p] f32."""
    n, hp, wp, cin = xpad.shape
    ntap, _, cout_p = w_packed.shape
    kh = kw = int(round(math.sqrt(ntap)))
    oh, ow = hp - kh + 1, wp - kw + 1
    th = math.gcd(oh, 8)
    return pl.pallas_call(
        functools.partial(_conv7_tanh_kernel, th=th, ow=ow, kh=kh, kw=kw),
        out_shape=jax.ShapeDtypeStruct((n, oh * ow, cout_p), jnp.float32),
        grid_spec=pltpu.PrefetchScalarGridSpec(
            num_scalar_prefetch=0,
            grid=(n, oh // th),
            in_specs=[
                pl.BlockSpec((None, hp, wp, cin), lambda b, i: (b, 0, 0, 0)),
                pl.BlockSpec((ntap, cin, cout_p), lambda b, i: (0, 0, 0)),
                pl.BlockSpec((1, cout_p), lambda b, i: (0, 0)),
            ],
            out_specs=pl.BlockSpec((None, th * ow, cout_p), lambda b, i: (b, i, 0)),
            scratch_shapes=[pltpu.VMEM((th * ow, cout_p), jnp.float32)],
        ),
        compiler_params=pltpu.CompilerParams(
            dimension_semantics=("parallel", "arbitrary")),
    )(xpad, w_packed, bias_p)


# ------------------------- weight packing (done once, at init) -------------------------

def pack_conv_transpose_weight(w_ct):
    """w_ct: [Cin, Cout, 3, 3] (PyTorch ConvTranspose2d layout) ->
    [9*Cin, Cout_p] bf16, taps ordered per TAP_KYKX (grouped by output parity)."""
    cin, cout = w_ct.shape[:2]
    cout_p = _round_up(cout, 128)
    blocks = [w_ct[:, :, ky, kx] for (ky, kx) in TAP_KYKX]      # each [Cin, Cout]
    b = jnp.concatenate(blocks, axis=0)
    b = jnp.pad(b, ((0, 0), (0, cout_p - cout)))
    return b.astype(jnp.bfloat16)


def pack_conv2d_weight(w, kh=7, kw=7):
    """w: [Cout, Cin, kh, kw] (PyTorch Conv2d layout) -> [kh*kw, Cin, Cout_p] bf16."""
    cout, cin = w.shape[:2]
    cout_p = _round_up(cout, 128)
    taps = [w[:, :, ky, kx].T for ky in range(kh) for kx in range(kw)]   # [Cin, Cout]
    wt = jnp.stack(taps, axis=0)
    wt = jnp.pad(wt, ((0, 0), (0, 0), (0, cout_p - cout)))
    return wt.astype(jnp.bfloat16)


# ------------------------- the Decoder -------------------------

def init_params(key, ngf=NGF, n_down=N_DOWNSAMPLING):
    params = {"up": []}
    for i in range(n_down):
        mult = 2 ** (n_down - i)
        cin, cout = ngf * mult, (ngf * mult) // 2
        key, k1 = jax.random.split(key)
        bound = 1.0 / math.sqrt(cout * 3 * 3)
        w = jax.random.uniform(k1, (cin, cout, 3, 3), jnp.float32, -bound, bound)
        params["up"].append({
            "w": pack_conv_transpose_weight(w),
            "gamma": jnp.ones((cout,), jnp.float32),
            "beta": jnp.zeros((cout,), jnp.float32),
        })
    key, k1, k2 = jax.random.split(key, 3)
    bound = 1.0 / math.sqrt(ngf * 7 * 7)
    wf = jax.random.uniform(k1, (3, ngf, 7, 7), jnp.float32, -bound, bound)
    bf = jax.random.uniform(k2, (3,), jnp.float32, -bound, bound)
    params["final_w"] = pack_conv2d_weight(wf, 7, 7)
    cout_p = params["final_w"].shape[-1]
    params["final_b"] = jnp.pad(bf, (0, cout_p - 3)).reshape(1, cout_p)
    return params


def decoder_forward(x, params):
    """x: [N, 2048, H, W] NCHW f32 -> [N, 3, 32*H, 32*W] f32."""
    h = jnp.transpose(x, (0, 2, 3, 1)).astype(jnp.bfloat16)     # NHWC bf16
    for layer in params["up"]:
        cout = layer["gamma"].shape[0]
        cout_p = layer["w"].shape[1]
        out, (n, hh, ww) = conv_transpose2d_parity(h, layer["w"])
        y = _parity_to_nhwc(out, n, hh, ww, cout, cout_p)        # [N,2H,2W,C] f32
        y = bn_relu(y.reshape(n * 2 * hh * 2 * ww, cout),
                    layer["gamma"], layer["beta"])               # bf16
        h = y.reshape(n, 2 * hh, 2 * ww, cout)
    # ReflectionPad2d(3) -> Conv2d(64,3,7) -> Tanh (fused kernel)
    n, H, W, _ = h.shape
    hp = jnp.pad(h, ((0, 0), (3, 3), (3, 3), (0, 0)), mode="reflect")
    out = conv7x7_tanh(hp, params["final_w"], params["final_b"])
    out = out[:, :, :3].reshape(n, H, W, 3)
    return jnp.transpose(out, (0, 3, 1, 2))


# ------------------------- references for self-checking -------------------------

def _conv_transpose2d_ref(x, w):
    """Direct ConvTranspose2d(k=3,s=2,p=1,op=1) definition.  x: [N,H,W,Ci] f32,
    w: [Ci,Co,3,3] f32 -> [N,2H,2W,Co] f32."""
    n, h, ww, _ = x.shape
    co = w.shape[1]
    out = jnp.zeros((n, 2 * h, 2 * ww, co), jnp.float32)
    for iy in range(h):
        for ix in range(ww):
            for ky in range(3):
                for kx in range(3):
                    oy, ox = 2 * iy - 1 + ky, 2 * ix - 1 + kx
                    if 0 <= oy < 2 * h and 0 <= ox < 2 * ww:
                        out = out.at[:, oy, ox, :].add(
                            jnp.matmul(x[:, iy, ix, :], w[:, :, ky, kx],
                                       precision=jax.lax.Precision.HIGHEST))
    return out


def _conv7_tanh_ref(xpad, w, b):
    n, hp, wp, _ = xpad.shape
    oh, ow = hp - 6, wp - 6
    out = jnp.zeros((n, oh, ow, w.shape[0]), jnp.float32)
    for ky in range(7):
        for kx in range(7):
            out = out + jnp.einsum("nhwi,io->nhwo",
                                   xpad[:, ky:ky + oh, kx:kx + ow, :],
                                   w[:, :, ky, kx].T,
                                   precision=jax.lax.Precision.HIGHEST)
    return jnp.tanh(out + b)


def _self_check():
    key = jax.random.PRNGKey(42)
    k1, k2, k3, k4, k5 = jax.random.split(key, 5)

    # conv-transpose parity kernel vs direct definition
    ci, co, hh, ww = 128, 128, 2, 3
    x = jax.random.normal(k1, (1, hh, ww, ci), jnp.float32)
    w = jax.random.normal(k2, (ci, co, 3, 3), jnp.float32) * 0.05
    xq = x.astype(jnp.bfloat16).astype(jnp.float32)
    wq = w.astype(jnp.bfloat16).astype(jnp.float32)
    bp = pack_conv_transpose_weight(wq)
    out, (n_, h_, w_) = conv_transpose2d_parity(xq.astype(jnp.bfloat16), bp)
    got = _parity_to_nhwc(out, n_, h_, w_, co, bp.shape[1])
    want = _conv_transpose2d_ref(xq, wq)
    err = float(jnp.max(jnp.abs(got - want)))
    scale = float(jnp.max(jnp.abs(want))) + 1e-6
    assert err <= 2e-2 * scale, (err, scale)

    # fused 7x7 conv + tanh kernel vs reference
    ci, co, hh, ww = 64, 3, 16, 16
    x = jax.random.normal(k3, (1, hh, ww, ci), jnp.float32) * 0.5
    w = jax.random.normal(k4, (co, ci, 7, 7), jnp.float32) * 0.05
    b = jax.random.normal(k5, (co,), jnp.float32) * 0.1
    xq = x.astype(jnp.bfloat16).astype(jnp.float32)
    wq = w.astype(jnp.bfloat16).astype(jnp.float32)
    xpad = jnp.pad(xq, ((0, 0), (3, 3), (3, 3), (0, 0)), mode="reflect")
    wp_ = pack_conv2d_weight(wq, 7, 7)
    cp = wp_.shape[-1]
    bp_ = jnp.pad(b, (0, cp - co)).reshape(1, cp)
    got = conv7x7_tanh(xpad.astype(jnp.bfloat16), wp_, bp_)[:, :, :co]
    got = got.reshape(1, hh, ww, co)
    want = _conv7_tanh_ref(xpad, wq, b)
    err = float(jnp.max(jnp.abs(got - want)))
    assert err <= 2e-2, err


if __name__ == "__main__":
    _self_check()

    key = jax.random.PRNGKey(0)
    kp, kx = jax.random.split(key)
    params = init_params(kp)

    # Channel counts are fixed by the module (ngf*2^5 = 2048 in-channels);
    # keep spatial size small: 2x2 -> 64x64 after 5 stride-2 upsamples.
    x = jax.random.normal(kx, (1, NGF * 2 ** N_DOWNSAMPLING, 2, 2), jnp.float32)

    fwd = jax.jit(decoder_forward)
    out = jax.block_until_ready(fwd(x, params))

    assert out.shape == (1, 3, 64, 64), out.shape
    assert bool(jnp.all(jnp.isfinite(out)))
    assert bool(jnp.all(jnp.abs(out) <= 1.0 + 1e-6))   # tanh range
    print("KERNEL_OK")
</pallas_src>

<mosaic_0001>
module attributes {stable_mosaic.version = 11 : i64} {
  func.func @_tap_matmul_kernel(%arg0: i32, %arg1: i32, %arg2: memref<9xi32, #tpu.memory_space<smem>>, %arg3: memref<9xi32, #tpu.memory_space<smem>>, %arg4: memref<9xi32, #tpu.memory_space<smem>>, %arg5: memref<9xi32, #tpu.memory_space<smem>>, %arg6: memref<8x128xbf16, #tpu.memory_space<vmem>>, %arg7: memref<128x128xbf16, #tpu.memory_space<vmem>>, %arg8: memref<8x128xf32, #tpu.memory_space<vmem>>, %arg9: memref<8x128xf32, #tpu.memory_space<vmem>>) attributes {dimension_semantics = [#tpu.dimension_semantics<parallel>, #tpu.dimension_semantics<arbitrary>], iteration_bounds = array<i64: 1, 9>, scalar_prefetch = 4 : i64, scratch_operands = 1 : i64, tpu.core_type = #tpu.core_type<tc>, window_params = [{transform_indices = @transform_0, window_bounds = array<i64: 8, 128>}, {transform_indices = @transform_1, window_bounds = array<i64: 128, 128>}, {transform_indices = @transform_2, window_bounds = array<i64: 8, 128>}]} {
    %0 = arith.index_cast %arg1 : i32 to index
    %1 = memref.load %arg4[%0] : memref<9xi32, #tpu.memory_space<smem>>
    %c1_i32 = arith.constant 1 : i32
    %2 = arith.cmpi eq, %1, %c1_i32 : i32
    %3 = arith.extui %2 : i1 to i32
    %c0_i32 = arith.constant 0 : i32
    %4 = arith.cmpi ne, %3, %c0_i32 : i32
    scf.if %4 {
      %cst_9 = arith.constant 0.000000e+00 : f32
      %16 = vector.broadcast %cst_9 : f32 to vector<8x128xf32>
      %c0_10 = arith.constant 0 : index
      %c0_11 = arith.constant 0 : index
      %17 = vector.load %arg9[%c0_10, %c0_11] : memref<8x128xf32, #tpu.memory_space<vmem>>, vector<8x128xf32>
      tpu.vector_store %arg9[%c0_10, %c0_11], %16 {strides = array<i32>} : memref<8x128xf32, #tpu.memory_space<vmem>>, vector<8x128xf32>,
    } else {
    }
    %c0 = arith.constant 0 : index
    %c0_0 = arith.constant 0 : index
    %5 = vector.load %arg9[%c0, %c0_0] : memref<8x128xf32, #tpu.memory_space<vmem>>, vector<8x128xf32>
    %c0_1 = arith.constant 0 : index
    %c0_2 = arith.constant 0 : index
    %6 = vector.load %arg6[%c0_1, %c0_2] : memref<8x128xbf16, #tpu.memory_space<vmem>>, vector<8x128xbf16>
    %c0_3 = arith.constant 0 : index
    %c0_4 = arith.constant 0 : index
    %7 = vector.load %arg7[%c0_3, %c0_4] : memref<128x128xbf16, #tpu.memory_space<vmem>>, vector<128x128xbf16>
    %cst = arith.constant dense<0.000000e+00> : vector<8x128xf32>
    %8 = tpu.matmul %6, %7, %cst {dimension_numbers = #tpu.dot_dimension_numbers<[1], [0], [0], [1], [0, 0, 1, 1], [], []>} : vector<8x128xbf16>, vector<128x128xbf16>, vector<8x128xf32> -> vector<8x128xf32>
    %9 = arith.addf %5, %8 : vector<8x128xf32>
    %c0_5 = arith.constant 0 : index
    %c0_6 = arith.constant 0 : index
    %10 = vector.load %arg9[%c0_5, %c0_6] : memref<8x128xf32, #tpu.memory_space<vmem>>, vector<8x128xf32>
    tpu.vector_store %arg9[%c0_5, %c0_6], %9 {strides = array<i32>} : memref<8x128xf32, #tpu.memory_space<vmem>>, vector<8x128xf32>,
    %11 = arith.index_cast %arg1 : i32 to index
    %12 = memref.load %arg5[%11] : memref<9xi32, #tpu.memory_space<smem>>
    %c1_i32_7 = arith.constant 1 : i32
    %13 = arith.cmpi eq, %12, %c1_i32_7 : i32
    %14 = arith.extui %13 : i1 to i32
    %c0_i32_8 = arith.constant 0 : i32
    %15 = arith.cmpi ne, %14, %c0_i32_8 : i32
    scf.if %15 {
      %c0_9 = arith.constant 0 : index
      %c0_10 = arith.constant 0 : index
      %16 = vector.load %arg9[%c0_9, %c0_10] : memref<8x128xf32, #tpu.memory_space<vmem>>, vector<8x128xf32>
      %c0_11 = arith.constant 0 : index
      %c0_12 = arith.constant 0 : index
      %17 = vector.load %arg8[%c0_11, %c0_12] : memref<8x128xf32, #tpu.memory_space<vmem>>, vector<8x128xf32>
      tpu.vector_store %arg8[%c0_11, %c0_12], %16 {strides = array<i32>} : memref<8x128xf32, #tpu.memory_space<vmem>>, vector<8x128xf32>,
    } else {
    }
    return
  }
  func.func @transform_0(%arg0: i32, %arg1: i32, %arg2: memref<9xi32, #tpu.memory_space<smem>>, %arg3: memref<9xi32, #tpu.memory_space<smem>>, %arg4: memref<9xi32, #tpu.memory_space<smem>>, %arg5: memref<9xi32, #tpu.memory_space<smem>>) -> (i32, i32) {
    %0 = arith.index_cast %arg1 : i32 to index
    %1 = memref.load %arg2[%0] : memref<9xi32, #tpu.memory_space<smem>>
    %c0_i32 = arith.constant 0 : i32
    return %arg0, %1 : i32, i32
  }
  func.func @transform_1(%arg0: i32, %arg1: i32, %arg2: memref<9xi32, #tpu.memory_space<smem>>, %arg3: memref<9xi32, #tpu.memory_space<smem>>, %arg4: memref<9xi32, #tpu.memory_space<smem>>, %arg5: memref<9xi32, #tpu.memory_space<smem>>) -> (i32, i32) {
    %c0_i32 = arith.constant 0 : i32
    %c0_i32_0 = arith.constant 0 : i32
    return %arg1, %c0_i32 : i32, i32
  }
  func.func @transform_2(%arg0: i32, %arg1: i32, %arg2: memref<9xi32, #tpu.memory_space<smem>>, %arg3: memref<9xi32, #tpu.memory_space<smem>>, %arg4: memref<9xi32, #tpu.memory_space<smem>>, %arg5: memref<9xi32, #tpu.memory_space<smem>>) -> (i32, i32) {
    %0 = arith.index_cast %arg1 : i32 to index
    %1 = memref.load %arg3[%0] : memref<9xi32, #tpu.memory_space<smem>>
    %c0_i32 = arith.constant 0 : i32
    return %arg0, %1 : i32, i32
  }
}

</mosaic_0001>

<llo_original>
// kernel: tpu_custom_call.1
$region0: #{tpu_custom_call.1}
  #allocation0 [shape = 'u32[]', space=smem, size = 0x4, offset = 0x4, fixed_abs, tag = 'smem constant byte address 0x4 - core index']
  #allocation1 [shape = 'u32[72,128]{1,0:T(1,128)}', space=vmem, size = 0x9000, scoped, tag = 'internal scratch']
  #allocation2 [shape = 'f32[8,128]{1,0:T(8,128)}', space=vmem, size = 0x1000, scoped, tag = 'scratch operand']
  #allocation3 [shape = 's32[1]{0}', space=sflag, size = 0x4, scoped, tag = 'scoped memory for tpu_custom_call.1']
  #allocation4 [shape = 'u8[512]{0}', space=smem, size = 0x200, scoped, tag = 'prefetched SMEM operand 0']
  #allocation5 [shape = 'u8[512]{0}', space=smem, size = 0x200, scoped, tag = 'prefetched SMEM operand 1']
  #allocation6 [shape = 'u8[512]{0}', space=smem, size = 0x200, scoped, tag = 'prefetched SMEM operand 2']
  #allocation7 [shape = 'u8[512]{0}', space=smem, size = 0x200, scoped, tag = 'prefetched SMEM operand 3']
  %s0 = inlined_call_operand.hbm [shape: s32[9], index: 0, kind: input, shape index: {}]
  %s1 = inlined_call_operand.hbm [shape: s32[9], index: 1, kind: input, shape index: {}]
  %s2 = inlined_call_operand.vmem [shape: s32[9], index: 2, kind: input, shape index: {}]
  %s3 = inlined_call_operand.vmem [shape: s32[9], index: 3, kind: input, shape index: {}]
  %s4 = inlined_call_operand.hbm [shape: bf16[8,512], index: 4, kind: input, shape index: {}]
  %s5 = inlined_call_operand.hbm [shape: bf16[1152,128], index: 5, kind: input, shape index: {}]
  %s6 = inlined_call_operand.hbm [shape: f32[8,512], index: 6, kind: output, shape index: {}]
  %s7 = sld [smem:[#allocation0]]
  $region57: #{tpu_custom_call.1} parent=0
    _
  %s9 = ssub.s32 1, %s7
  %s10 = scalar_select 0, %s9, %s7
  %s12 = sshll.u32 %s0, 4
  %s13 = int_to_ptr.hbm [resolvable:$true] %s12
  %15 = dma.hbm_to_smem %s13, 16, [#allocation4], [#allocation3]
  %s17 = sshll.u32 %s1, 4
  %s18 = int_to_ptr.hbm [resolvable:$true] %s17
  %20 = dma.hbm_to_smem %s18, 16, [#allocation5], [#allocation3]
  %s22 = sshll.u32 %s2, 4
  %s23 = int_to_ptr.vmem [resolvable:$true] %s22
  %25 = dma.vmem_to_smem %s23, 16, [#allocation6], [#allocation3]
  %s27 = sshll.u32 %s3, 4
  %s28 = int_to_ptr.vmem [resolvable:$true] %s27
  %30 = dma.vmem_to_smem %s28, 16, [#allocation7], [#allocation3]
  %32 = dma.done [#allocation3], 64
  %33 = sfence
  $region1: #{tpu_custom_call.1} parent=0
    #allocation8 [shape = 'u8[4096]{0}', space=vmem, size = 0x1000, scoped, tag = 'input window, operand 4']
    #allocation9 [shape = 's32[2]{0}', space=sflag, size = 0x8, scoped, tag = 'scoped memory for tpu_custom_call.1']
    #allocation10 [shape = 's32[2]{0}', space=sflag, size = 0x8, scoped, tag = 'scoped memory for tpu_custom_call.1']
    #allocation11 [shape = 'u8[65536]{0}', space=vmem, size = 0x10000, scoped, tag = 'input window, operand 5']
    #allocation12 [shape = 's32[2]{0}', space=sflag, size = 0x8, scoped, tag = 'scoped memory for tpu_custom_call.1']
    #allocation13 [shape = 'u8[8192]{0}', space=vmem, size = 0x2000, scoped, tag = 'output window, operand 0']
    %34 = vsyncpa [#allocation9], 0
    %s35 = scalar_lea.sflag [#allocation9], 1
    %36 = vsyncpa %s35, 0
    %37 = vsyncpa [#allocation12], 0
    %s38 = scalar_lea.sflag [#allocation12], 1
    %39 = vsyncpa %s38, 0
    %40 = vsyncpa [#allocation10], 0
    %s41 = scalar_lea.sflag [#allocation10], 1
    %42 = vsyncpa %s41, 0
    loop: start=0, step=1, limit=11
    $region2: #{tpu_custom_call.1} parent=1 // loop_pre_header
      _
    $region3: #{tpu_custom_call.1} parent=1 // loop_header
      %s44 = sphi 0, %s48
      %p45 = scmp.ge.s32.totalorder %s44, 11
      %s51 = sphi 0, %s63
      %s52 = sphi 0, %s59
      %s53 = sphi 0, %s51
      %s54 = sphi 0, %s52
      %s55 = sphi 0, %s53
      %s56 = sphi 0, %s54
      %s70 = sphi 0, %s72
      %s73 = sphi 0, %s70
      %s74 = sphi 0, %s73
      %s90 = sphi 0, %s74
      %s96 = sphi 0, %s98
      %s99 = sphi 0, %s96
      %s100 = sphi 0, %s99
      %s116 = sphi 0, %s100
      %s126 = sphi 0, %s128
      %s129 = sphi 0, %s126
      %s130 = sphi 0, %s129
      %s146 = sphi 0, %s130
    $region4: #{tpu_custom_call.1} parent=1 // loop_header_branch
      %47 = sbr.rel (%p45) target = $region8
    $region5: #{tpu_custom_call.1} parent=1 // loop_body
      %s49 = ssub.s32 %s44, 1
      %s50 = ssub.s32 %s44, 2
      %s57 = sadd.s32 1, %s52
      %p58 = scmp.ge.s32.totalorder %s57, 9
      %s59 = scalar_select %p58, 0, %s57
      %s60 = sadd.s32 1, %s51
      %s61 = scalar_select %p58, %s60, %s51
      %p62 = scmp.ge.s32.totalorder %s61, 1
      %s63 = scalar_select %p62, 0, %s61
      %s64 = sld [smem:[#allocation4 + %s52]]
      %s65 = sld [smem:[#allocation4 + %s59]]
      %s66 = ssub.s32 %s51, %s63
      %s67 = ssub.s32 %s64, %s65
      %s68 = sor.u32 %s66, %s67
      %p69 = scmp.eq.s32.totalorder %s68, 0
      %s71 = sadd.s32 %s70, 1
      %s72 = scalar_select %p69, %s70, %s71
      %p75 = pneg %p69
      %p76 = scmp.eq.s32.totalorder %s44, 8
      %p77 = por %p75, %p76
      %p78 = scmp.ne.s32.totalorder %s70, %s73
      %p79 = scmp.eq.s32.totalorder %s44, 0
      %p80 = por %p78, %p79
      %p81 = scmp.ne.s32.totalorder %s70, %s73
      %p82 = scmp.eq.s32.totalorder %s49, 8
      %p83 = por %p81, %p82
      %p84 = scmp.ne.s32.totalorder %s73, %s74
      %p85 = scmp.eq.s32.totalorder %s49, 0
      %p86 = por %p84, %p85
      %p87 = scmp.ne.s32.totalorder %s73, %s74
      %p88 = scmp.eq.s32.totalorder %s50, 8
      %p89 = por %p87, %p88
      %p91 = scmp.ne.s32.totalorder %s74, %s90
      %p92 = scmp.eq.s32.totalorder %s50, 0
      %p93 = por %p91, %p92
      %s94 = ssub.s32 %s52, %s59
      %p95 = scmp.eq.s32.totalorder %s94, 0
      %s97 = sadd.s32 %s96, 1
      %s98 = scalar_select %p95, %s96, %s97
      %p101 = pneg %p95
      %p102 = scmp.eq.s32.totalorder %s44, 8
      %p103 = por %p101, %p102
      %p104 = scmp.ne.s32.totalorder %s96, %s99
      %p105 = scmp.eq.s32.totalorder %s44, 0
      %p106 = por %p104, %p105
      %p107 = scmp.ne.s32.totalorder %s96, %s99
      %p108 = scmp.eq.s32.totalorder %s49, 8
      %p109 = por %p107, %p108
      %p110 = scmp.ne.s32.totalorder %s99, %s100
      %p111 = scmp.eq.s32.totalorder %s49, 0
      %p112 = por %p110, %p111
      %p113 = scmp.ne.s32.totalorder %s99, %s100
      %p114 = scmp.eq.s32.totalorder %s50, 8
      %p115 = por %p113, %p114
      %p117 = scmp.ne.s32.totalorder %s100, %s116
      %p118 = scmp.eq.s32.totalorder %s50, 0
      %p119 = por %p117, %p118
      %s120 = sld [smem:[#allocation5 + %s52]]
      %s121 = sld [smem:[#allocation5 + %s59]]
      %s122 = ssub.s32 %s51, %s63
      %s123 = ssub.s32 %s120, %s121
      %s124 = sor.u32 %s122, %s123
      %p125 = scmp.eq.s32.totalorder %s124, 0
      %s127 = sadd.s32 %s126, 1
      %s128 = scalar_select %p125, %s126, %s127
      %p131 = pneg %p125
      %p132 = scmp.eq.s32.totalorder %s44, 8
      %p133 = por %p131, %p132
      %p134 = scmp.ne.s32.totalorder %s126, %s129
      %p135 = scmp.eq.s32.totalorder %s44, 0
      %p136 = por %p134, %p135
      %p137 = scmp.ne.s32.totalorder %s126, %s129
      %p138 = scmp.eq.s32.totalorder %s49, 8
      %p139 = por %p137, %p138
      %p140 = scmp.ne.s32.totalorder %s129, %s130
      %p141 = scmp.eq.s32.totalorder %s49, 0
      %p142 = por %p140, %p141
      %p143 = scmp.ne.s32.totalorder %s129, %s130
      %p144 = scmp.eq.s32.totalorder %s50, 8
      %p145 = por %p143, %p144
      %p147 = scmp.ne.s32.totalorder %s130, %s146
      %p148 = scmp.eq.s32.totalorder %s50, 0
      %p149 = por %p147, %p148
      %p150 = scmp.le.s32.totalorder 1, %s44
      %p151 = scmp.lt.s32.totalorder %s44, 10
      %p152 = pnand %p150, %p151
      %p153 = pneg %p152
      // Predicated region
      $region9: #{tpu_custom_call.1} parent=5 // pred_check
        _
      $region10: #{tpu_custom_call.1} parent=5 // pred_check_branch
        %155 = sbr.rel (%p152) target = $region12
      $region11: #{tpu_custom_call.1} parent=5 // pred_region
        %s156 = ssub.s32 %s44, 1
      $region12: #{tpu_custom_call.1} parent=5 // pred_fallthru
        _
      %p157 = scmp.lt.s32.totalorder %s44, 9
      // Predicated region
      $region13: #{tpu_custom_call.1} parent=5 // pred_check
        %p158 = pneg %p157
      $region14: #{tpu_custom_call.1} parent=5 // pred_check_branch
        %160 = sbr.rel (%p158) target = $region16
      $region15: #{tpu_custom_call.1} parent=5 // pred_region
        // Predicated region
        $region17: #{tpu_custom_call.1} parent=15 // pred_check
          %p161 = pneg %p80
        $region18: #{tpu_custom_call.1} parent=15 // pred_check_branch
          %163 = sbr.rel (%p161) target = $region20
        $region19: #{tpu_custom_call.1} parent=15 // pred_region
          %s164 = sand.u32 %s70, 1
          %s165 = scalar_lea.sflag [#allocation9], %s164
          %s166 = sand.u32 %s70, 1
          %s167 = smul.addr %s166, 4
          %s168 = scalar_lea.vmem [#allocation8], %s167
          %s169 = sld [smem:[#allocation4 + %s52]]
          %171 = vsyncadd %s165, 0
          %s172 = smul.addr %s51, 4
          %s173 = sadd.s32 %s169, %s172
          %s174 = smul.addr %s173, 4
          %s175 = scalar_lea.hbm %s4, %s174
          %s177 = sshll.u32 %s175, 4
          %s178 = int_to_ptr.hbm [resolvable:$true] %s177
          %s179 = sshll.u32 %s168, 4
          %s180 = int_to_ptr.vmem [resolvable:$true] %s179
          %182 = dma.hbm_to_vmem [thread:$0]  %s178, 64, %s180, %s165
        $region20: #{tpu_custom_call.1} parent=15 // pred_fallthru
          _
        // Predicated region
        $region21: #{tpu_custom_call.1} parent=15 // pred_check
          %p183 = pneg %p106
        $region22: #{tpu_custom_call.1} parent=15 // pred_check_branch
          %185 = sbr.rel (%p183) target = $region24
        $region23: #{tpu_custom_call.1} parent=15 // pred_region
          %s186 = sand.u32 %s96, 1
          %s187 = scalar_lea.sflag [#allocation12], %s186
          %s188 = sand.u32 %s96, 1
          %s189 = smul.addr %s188, 64
          %s190 = scalar_lea.vmem [#allocation11], %s189
          %s191 = smul.u32 16, %s52
          %193 = vsyncadd %s187, 0
          %s194 = smul.addr %s191, 4
          %s195 = scalar_lea.hbm %s5, %s194
          %s196 = sshll.u32 %s195, 4
          %s197 = int_to_ptr.hbm [resolvable:$true] %s196
          %s198 = sshll.u32 %s190, 4
          %s199 = int_to_ptr.vmem [resolvable:$true] %s198
          %204 = dma.hbm_to_vmem [thread:$0]  %s197, 1024, %s199, %s187, 64, 64, 4
        $region24: #{tpu_custom_call.1} parent=15 // pred_fallthru
          _
      $region16: #{tpu_custom_call.1} parent=5 // pred_fallthru
        _
      %p205 = scmp.le.s32.totalorder 1, %s44
      %p206 = scmp.lt.s32.totalorder %s44, 10
      %p207 = pnand %p205, %p206
      %p208 = pneg %p207
      // Predicated region
      $region25: #{tpu_custom_call.1} parent=5 // pred_check
        _
      $region26: #{tpu_custom_call.1} parent=5 // pred_check_branch
        %210 = sbr.rel (%p207) target = $region28
      $region27: #{tpu_custom_call.1} parent=5 // pred_region
        %s211 = ssub.s32 %s44, 1
        %s212 = sand.u32 %s73, 1
        %s213 = scalar_lea.sflag [#allocation9], %s212
        %s214 = sand.u32 %s73, 1
        %s215 = smul.addr %s214, 4
        %s216 = scalar_lea.vmem [#allocation8], %s215
        // Predicated region
        $region29: #{tpu_custom_call.1} parent=27 // pred_check
          %p217 = pneg %p86
        $region30: #{tpu_custom_call.1} parent=27 // pred_check_branch
          %219 = sbr.rel (%p217) target = $region32
        $region31: #{tpu_custom_call.1} parent=27 // pred_region
          %221 = dma.done %s213, 64
        $region32: #{tpu_custom_call.1} parent=27 // pred_fallthru
          _
        %s222 = sand.u32 %s99, 1
        %s223 = scalar_lea.sflag [#allocation12], %s222
        %s224 = sand.u32 %s99, 1
        %s225 = smul.addr %s224, 64
        %s226 = scalar_lea.vmem [#allocation11], %s225
        // Predicated region
        $region33: #{tpu_custom_call.1} parent=27 // pred_check
          %p227 = pneg %p112
        $region34: #{tpu_custom_call.1} parent=27 // pred_check_branch
          %229 = sbr.rel (%p227) target = $region36
        $region35: #{tpu_custom_call.1} parent=27 // pred_region
          %231 = dma.done %s223, 1024
        $region36: #{tpu_custom_call.1} parent=27 // pred_fallthru
          _
        %s232 = sand.u32 %s73, 1
        %s233 = scalar_lea.sflag [#allocation9], %s232
        %s234 = sand.u32 %s73, 1
        %s235 = smul.addr %s234, 4
        %s236 = scalar_lea.vmem [#allocation8], %s235
        %p237 = pneg %p86
        %p238 = pneg %p83
        %s239 = sand.u32 %s99, 1
        %s240 = scalar_lea.sflag [#allocation12], %s239
        %s241 = sand.u32 %s99, 1
        %s242 = smul.addr %s241, 64
        %s243 = scalar_lea.vmem [#allocation11], %s242
        %p244 = pneg %p112
        %p245 = pneg %p109
        %p246 = pneg %p142
        %p247 = pneg %p139
        %s248 = sand.u32 %s129, 1
        %s249 = scalar_lea.sflag [#allocation10], %s248
        %s250 = sand.u32 %s129, 1
        %s251 = smul.addr %s250, 8
        %s252 = scalar_lea.vmem [#allocation13], %s251
        %s253 = sld [smem:[#allocation4 + %s54]]
        %s254 = smul.u32 16, %s54
        %s255 = sld [smem:[#allocation5 + %s54]]
        %s256 = sld [smem:[#allocation6 + %s54]]
        %p257 = scmp.eq.s32.totalorder %s256, 1
        // Predicated region
        $region37: #{tpu_custom_call.1} parent=27 // pred_check
          %p258 = pneg %p257
        $region38: #{tpu_custom_call.1} parent=27 // pred_check_branch
          %260 = sbr.rel (%p258) target = $region40
        $region39: #{tpu_custom_call.1} parent=27 // pred_region
          %261 = vst [vmem:[#allocation2] sm:$0xff] 0.0
        $region40: #{tpu_custom_call.1} parent=27 // pred_fallthru
          _
        %v262 = vld [vmem:[#allocation2] sm:$0xff]
        %v263 = vld [vmem:[%s216] sm:$0xf]
        %v264 = vld [vmem:[%s226] sm:$0xf]
        %v265 = vld [vmem:[%s226 + $0x4] sm:$0xf]
        %v266 = vld [vmem:[%s226 + $0x8] sm:$0xf]
        %v267 = vld [vmem:[%s226 + $0xc] sm:$0xf]
        %v268 = vld [vmem:[%s226 + $0x10] sm:$0xf]
        %v269 = vld [vmem:[%s226 + $0x14] sm:$0xf]
        %v270 = vld [vmem:[%s226 + $0x18] sm:$0xf]
        %v271 = vld [vmem:[%s226 + $0x1c] sm:$0xf]
        %v272 = vld [vmem:[%s226 + $0x20] sm:$0xf]
        %v273 = vld [vmem:[%s226 + $0x24] sm:$0xf]
        %v274 = vld [vmem:[%s226 + $0x28] sm:$0xf]
        %v275 = vld [vmem:[%s226 + $0x2c] sm:$0xf]
        %v276 = vld [vmem:[%s226 + $0x30] sm:$0xf]
        %v277 = vld [vmem:[%s226 + $0x34] sm:$0xf]
        %v278 = vld [vmem:[%s226 + $0x38] sm:$0xf]
        %v279 = vld [vmem:[%s226 + $0x3c] sm:$0xf]
        %v296 = vunpack.c.l.b16 %v264
        %v297 = vunpack.c.l.b16 %v265
        %v298 = vunpack.c.l.b16 %v266
        %v299 = vunpack.c.l.b16 %v267
        %v300 = vunpack.c.l.b16 %v268
        %v301 = vunpack.c.l.b16 %v269
        %v302 = vunpack.c.l.b16 %v270
        %v303 = vunpack.c.l.b16 %v271
        %v304 = vunpack.c.l.b16 %v272
        %v305 = vunpack.c.l.b16 %v273
        %v306 = vunpack.c.l.b16 %v274
        %v307 = vunpack.c.l.b16 %v275
        %v308 = vunpack.c.l.b16 %v276
        %v309 = vunpack.c.l.b16 %v277
        %v310 = vunpack.c.l.b16 %v278
        %v311 = vunpack.c.l.b16 %v279
        %v312 = vpack.c.b16 %v297, %v296
        %v313 = vpack.c.b16 %v299, %v298
        %v314 = vpack.c.b16 %v301, %v300
        %v315 = vpack.c.b16 %v303, %v302
        %v316 = vpack.c.b16 %v305, %v304
        %v317 = vpack.c.b16 %v307, %v306
        %v318 = vpack.c.b16 %v309, %v308
        %v319 = vpack.c.b16 %v311, %v310
        %328 = vmatpush.bf16.msra.mxu0 %v319
        %329 = vmatpush.bf16.msra.mxu0 %v318
        %330 = vmatpush.bf16.msra.mxu0 %v317
        %331 = vmatpush.bf16.msra.mxu0 %v316
        %332 = vmatpush.bf16.msra.mxu0 %v315
        %333 = vmatpush.bf16.msra.mxu0 %v314
        %334 = vmatpush.bf16.msra.mxu0 %v313
        %335 = vmatpush.bf16.msra.mxu0 %v312
        %336 = vmatmul.bf16.gmra.mxu0 %v263
        %v337 = vpop.f32.mrf.mxu0
        %v338 = vadd.f32 0.0, %v337
        %v339 = vpop.f32.mrf.mxu0
        %340 = vdwg.mxu0
        %v341 = vadd.f32 %v262, %v338
        %342 = vst [vmem:[#allocation2] sm:$0xff] %v341
        %s343 = sld [smem:[#allocation7 + %s54]]
        %p344 = scmp.eq.s32.totalorder %s343, 1
        // Predicated region
        $region41: #{tpu_custom_call.1} parent=27 // pred_check
          %p345 = pneg %p344
        $region42: #{tpu_custom_call.1} parent=27 // pred_check_branch
          %347 = sbr.rel (%p345) target = $region44
        $region43: #{tpu_custom_call.1} parent=27 // pred_region
          %v348 = vld [vmem:[#allocation2] sm:$0xff]
          %349 = vst [vmem:[%s252] sm:$0xff] %v348
        $region44: #{tpu_custom_call.1} parent=27 // pred_fallthru
          _
        %s350 = sand.u32 %s129, 1
        %s351 = scalar_lea.sflag [#allocation10], %s350
        %s352 = sand.u32 %s129, 1
        %s353 = smul.addr %s352, 8
        %s354 = scalar_lea.vmem [#allocation13], %s353
        // Predicated region
        $region45: #{tpu_custom_call.1} parent=27 // pred_check
          %p355 = pneg %p139
        $region46: #{tpu_custom_call.1} parent=27 // pred_check_branch
          %357 = sbr.rel (%p355) target = $region48
        $region47: #{tpu_custom_call.1} parent=27 // pred_region
          %s358 = sld [smem:[#allocation5 + %s54]]
          %360 = vsyncadd %s351, 0
          %s361 = smul.addr %s53, 4
          %s362 = sadd.s32 %s358, %s361
          %s363 = smul.addr %s362, 8
          %s364 = scalar_lea.hbm %s6, %s363
          %s366 = sshll.u32 %s354, 4
          %s367 = int_to_ptr.vmem [resolvable:$true] %s366
          %s368 = sshll.u32 %s364, 4
          %s369 = int_to_ptr.hbm [resolvable:$true] %s368
          %371 = dma.vmem_to_hbm [thread:$0]  %s367, 128, %s369, %s351
        $region48: #{tpu_custom_call.1} parent=27 // pred_fallthru
          _
      $region28: #{tpu_custom_call.1} parent=5 // pred_fallthru
        _
      %p372 = scmp.le.s32.totalorder 2, %s44
      // Predicated region
      $region49: #{tpu_custom_call.1} parent=5 // pred_check
        %p373 = pneg %p372
      $region50: #{tpu_custom_call.1} parent=5 // pred_check_branch
        %375 = sbr.rel (%p373) target = $region52
      $region51: #{tpu_custom_call.1} parent=5 // pred_region
        %s376 = ssub.s32 %s44, 2
        // Predicated region
        $region53: #{tpu_custom_call.1} parent=51 // pred_check
          %p377 = pneg %p145
        $region54: #{tpu_custom_call.1} parent=51 // pred_check_branch
          %379 = sbr.rel (%p377) target = $region56
        $region55: #{tpu_custom_call.1} parent=51 // pred_region
          %s380 = sand.u32 %s130, 1
          %s381 = scalar_lea.sflag [#allocation10], %s380
          %s382 = sand.u32 %s130, 1
          %s383 = smul.addr %s382, 8
          %s384 = scalar_lea.vmem [#allocation13], %s383
          %386 = dma.done %s381, 128
        $region56: #{tpu_custom_call.1} parent=51 // pred_fallthru
          _
      $region52: #{tpu_custom_call.1} parent=5 // pred_fallthru
        _
    $region6: #{tpu_custom_call.1} parent=1 // loop_footer
      %s48 = sadd.s32 1, %s44
    $region7: #{tpu_custom_call.1} parent=1 // loop_footer_branch
      %43 = sbr.rel target = $region3
    $region8: #{tpu_custom_call.1} parent=1 // loop_exit
      _
    %387 = vsyncpa [#allocation9], 1
    %s388 = scalar_lea.sflag [#allocation9], 1
    %389 = vsyncpa %s388, 1
    %390 = vsyncpa [#allocation12], 1
    %s391 = scalar_lea.sflag [#allocation12], 1
    %392 = vsyncpa %s391, 1
    %393 = vsyncpa [#allocation10], 1
    %s394 = scalar_lea.sflag [#allocation10], 1
    %395 = vsyncpa %s394, 1

</llo_original>
